<compile_context>
chip_gen: v5e
topology: v5e:2x2
jax: 0.10.0
libtpu: 0.0.40
codegen_flags: <defaults>
</compile_context>

<pallas_src>
import functools

import jax
import jax.numpy as jnp
from jax.experimental import pallas as pl
from jax.experimental.pallas import tpu as pltpu

LANE = 128     # vreg lane width  (last dim alignment)
SUBLANE = 8    # vreg sublane count (second-to-last dim alignment)


def _round_up(n, m):
    return ((n + m - 1) // m) * m


def dqn_kernel(x_ref, w1_ref, b1_ref, w2_ref, b2_ref, w3_ref, b3_ref, o_ref):
    """One (TB, state) row-tile of the fused 3-layer MLP.

    MXU matmuls with f32 accumulation; bias+relu stay on the VPU as filler
    under the MXU result pop. Weights/biases are VMEM-resident across the
    whole grid.
    """
    x = x_ref[...]
    h1 = jnp.maximum(
        jnp.dot(x, w1_ref[...], preferred_element_type=jnp.float32) + b1_ref[...],
        0.0)
    h1 = h1.astype(w2_ref.dtype)          # bf16 matmul inputs if weights are bf16
    h2 = jnp.maximum(
        jnp.dot(h1, w2_ref[...], preferred_element_type=jnp.float32) + b2_ref[...],
        0.0)
    h2 = h2.astype(w3_ref.dtype)
    out = jnp.dot(h2, w3_ref[...], preferred_element_type=jnp.float32) + b3_ref[...]
    o_ref[...] = out.astype(o_ref.dtype)


def pad_params(params, *, weight_dtype=jnp.float32):
    """Zero-pad the stored weight layout to lane-dense (multiple-of-128) shapes.

    Padding with zeros keeps the math exact: padded hidden lanes see
    relu(0 + 0) = 0 and padded weight rows contribute nothing; padded output
    columns are sliced off in the wrapper. Biases stay f32.
    """
    w1, b1, w2, b2, w3, b3 = params
    S, H = w1.shape
    A = w3.shape[1]
    Hp = _round_up(H, LANE)
    Ap = _round_up(A, LANE)

    def pad2(a, rows, cols, dtype):
        out = jnp.zeros((rows, cols), dtype)
        return out.at[: a.shape[0], : a.shape[1]].set(a.astype(dtype))

    return (
        pad2(w1, S, Hp, weight_dtype), pad2(b1, 1, Hp, jnp.float32),
        pad2(w2, Hp, Hp, weight_dtype), pad2(b2, 1, Hp, jnp.float32),
        pad2(w3, Hp, Ap, weight_dtype), pad2(b3, 1, Ap, jnp.float32),
    )


@functools.partial(jax.jit, static_argnames=("action_size", "block_batch"))
def dqn_forward(x, padded_params, action_size, block_batch=512):
    w1, b1, w2, b2, w3, b3 = padded_params
    B, S = x.shape
    Hp = w1.shape[1]
    Ap = w3.shape[1]

    # Batch tile: multiple of 8 sublanes, capped at block_batch (512 keeps the
    # per-step x DMA large enough for good HBM utilization while the whole
    # double-buffered footprint stays far under even v7x's 64 MiB VMEM).
    tb = min(block_batch, _round_up(B, SUBLANE))
    bp = _round_up(B, tb)

    # Cast x to the weight dtype (halves x HBM traffic on the bf16 path) and
    # zero-pad the batch so every grid step sees a full tile.
    x = x.astype(w1.dtype)
    if bp != B:
        x = jnp.zeros((bp, S), x.dtype).at[:B].set(x)

    out = pl.pallas_call(
        dqn_kernel,
        out_shape=jax.ShapeDtypeStruct((bp, Ap), jnp.float32),
        grid=(bp // tb,),
        in_specs=[
            pl.BlockSpec((tb, S), lambda i: (i, 0)),    # x: tiled over batch
            pl.BlockSpec((S, Hp), lambda i: (0, 0)),    # weights/biases stay
            pl.BlockSpec((1, Hp), lambda i: (0, 0)),    # VMEM-resident across
            pl.BlockSpec((Hp, Hp), lambda i: (0, 0)),   # all grid steps
            pl.BlockSpec((1, Hp), lambda i: (0, 0)),
            pl.BlockSpec((Hp, Ap), lambda i: (0, 0)),
            pl.BlockSpec((1, Ap), lambda i: (0, 0)),
        ],
        out_specs=pl.BlockSpec((tb, Ap), lambda i: (i, 0)),   # lane-dense store
        compiler_params=pltpu.CompilerParams(
            # Independent batch tiles -> megacore sharding on v7x.
            dimension_semantics=("parallel",),
        ),
    )(x, w1, b1, w2, b2, w3, b3)

    # Slice padded batch rows / padded action lanes back to the logical shape.
    return out[:B, :action_size]


def init_params(key, state_size, action_size, hidden=24):
    """Deterministic synthetic init (uniform, like PyTorch's default Linear)."""
    ks = jax.random.split(key, 6)

    def lin(kw, kb, fan_in, fan_out):
        bound = 1.0 / jnp.sqrt(fan_in)
        w = jax.random.uniform(kw, (fan_in, fan_out), jnp.float32, -bound, bound)
        b = jax.random.uniform(kb, (1, fan_out), jnp.float32, -bound, bound)
        return w, b

    w1, b1 = lin(ks[0], ks[1], state_size, hidden)
    w2, b2 = lin(ks[2], ks[3], hidden, hidden)
    w3, b3 = lin(ks[4], ks[5], hidden, action_size)
    return (w1, b1, w2, b2, w3, b3)


def _reference(x, params):
    w1, b1, w2, b2, w3, b3 = params
    h = jnp.maximum(x @ w1 + b1, 0.0)
    h = jnp.maximum(h @ w2 + b2, 0.0)
    return h @ w3 + b3


if __name__ == "__main__":
    key = jax.random.PRNGKey(0)
    k_x, k_x2, k_p = jax.random.split(key, 3)

    batch, state_size, action_size = 2, 8, 4
    x = jax.random.normal(k_x, (batch, state_size), jnp.float32)
    params = init_params(k_p, state_size, action_size)

    # --- f32 path (exact check against the plain-JAX / PyTorch math) ---
    pparams_f32 = pad_params(params, weight_dtype=jnp.float32)
    out = jax.block_until_ready(dqn_forward(x, pparams_f32, action_size))
    ref = _reference(x, params)
    assert out.shape == (batch, action_size)
    assert jnp.allclose(out, ref, atol=1e-5, rtol=1e-5), "f32 mismatch"

    # --- multi-step grid path (batch padding + several batch tiles) ---
    big_b = 200
    x_big = jax.random.normal(k_x2, (big_b, state_size), jnp.float32)
    out_big = jax.block_until_ready(
        dqn_forward(x_big, pparams_f32, action_size, block_batch=64))
    ref_big = _reference(x_big, params)
    assert out_big.shape == (big_b, action_size)
    assert jnp.allclose(out_big, ref_big, atol=1e-5, rtol=1e-5), "grid mismatch"

    # --- bf16 weight/activation path (v6e/v7x optimization; f32 accumulation) ---
    pparams_bf16 = pad_params(params, weight_dtype=jnp.bfloat16)
    out_bf16 = jax.block_until_ready(dqn_forward(x, pparams_bf16, action_size))
    assert out_bf16.shape == (batch, action_size)
    assert jnp.allclose(out_bf16, ref, atol=1e-1, rtol=1e-1), "bf16 mismatch"

    print("KERNEL_OK")
</pallas_src>

<mosaic_0001>
module attributes {stable_mosaic.version = 11 : i64} {
  func.func @dqn_kernel(%arg0: i32, %arg1: memref<8x8xf32, #tpu.memory_space<vmem>>, %arg2: memref<8x128xf32, #tpu.memory_space<vmem>>, %arg3: memref<1x128xf32, #tpu.memory_space<vmem>>, %arg4: memref<128x128xf32, #tpu.memory_space<vmem>>, %arg5: memref<1x128xf32, #tpu.memory_space<vmem>>, %arg6: memref<128x128xf32, #tpu.memory_space<vmem>>, %arg7: memref<1x128xf32, #tpu.memory_space<vmem>>, %arg8: memref<8x128xf32, #tpu.memory_space<vmem>>) attributes {dimension_semantics = [#tpu.dimension_semantics<parallel>], iteration_bounds = array<i64: 1>, scalar_prefetch = 0 : i64, scratch_operands = 0 : i64, tpu.core_type = #tpu.core_type<tc>, window_params = [{transform_indices = @transform_0, window_bounds = array<i64: 8, 8>}, {pipeline_mode = #tpu.pipeline_mode<synchronous>, transform_indices = @transform_1, window_bounds = array<i64: 8, 128>}, {pipeline_mode = #tpu.pipeline_mode<synchronous>, transform_indices = @transform_2, window_bounds = array<i64: 1, 128>}, {pipeline_mode = #tpu.pipeline_mode<synchronous>, transform_indices = @transform_3, window_bounds = array<i64: 128, 128>}, {pipeline_mode = #tpu.pipeline_mode<synchronous>, transform_indices = @transform_4, window_bounds = array<i64: 1, 128>}, {pipeline_mode = #tpu.pipeline_mode<synchronous>, transform_indices = @transform_5, window_bounds = array<i64: 128, 128>}, {pipeline_mode = #tpu.pipeline_mode<synchronous>, transform_indices = @transform_6, window_bounds = array<i64: 1, 128>}, {transform_indices = @transform_7, window_bounds = array<i64: 8, 128>}]} {
    %c0 = arith.constant 0 : index
    %c0_0 = arith.constant 0 : index
    %0 = vector.load %arg1[%c0, %c0_0] : memref<8x8xf32, #tpu.memory_space<vmem>>, vector<8x8xf32>
    %c0_1 = arith.constant 0 : index
    %c0_2 = arith.constant 0 : index
    %1 = vector.load %arg2[%c0_1, %c0_2] : memref<8x128xf32, #tpu.memory_space<vmem>>, vector<8x128xf32>
    %cst = arith.constant dense<0.000000e+00> : vector<8x128xf32>
    %2 = tpu.matmul %0, %1, %cst {dimension_numbers = #tpu.dot_dimension_numbers<[1], [0], [0], [1], [0, 0, 1, 1], [], []>} : vector<8x8xf32>, vector<8x128xf32>, vector<8x128xf32> -> vector<8x128xf32>
    %c0_3 = arith.constant 0 : index
    %c0_4 = arith.constant 0 : index
    %3 = vector.load %arg3[%c0_3, %c0_4] : memref<1x128xf32, #tpu.memory_space<vmem>>, vector<1x128xf32>
    %4 = vector.broadcast %3 : vector<1x128xf32> to vector<8x128xf32>
    %5 = arith.addf %2, %4 : vector<8x128xf32>
    %cst_5 = arith.constant 0.000000e+00 : f32
    %6 = vector.broadcast %cst_5 : f32 to vector<8x128xf32>
    %7 = arith.maximumf %5, %6 : vector<8x128xf32>
    %c0_6 = arith.constant 0 : index
    %c0_7 = arith.constant 0 : index
    %8 = vector.load %arg4[%c0_6, %c0_7] : memref<128x128xf32, #tpu.memory_space<vmem>>, vector<128x128xf32>
    %cst_8 = arith.constant dense<0.000000e+00> : vector<8x128xf32>
    %9 = tpu.matmul %7, %8, %cst_8 {dimension_numbers = #tpu.dot_dimension_numbers<[1], [0], [0], [1], [0, 0, 1, 1], [], []>} : vector<8x128xf32>, vector<128x128xf32>, vector<8x128xf32> -> vector<8x128xf32>
    %c0_9 = arith.constant 0 : index
    %c0_10 = arith.constant 0 : index
    %10 = vector.load %arg5[%c0_9, %c0_10] : memref<1x128xf32, #tpu.memory_space<vmem>>, vector<1x128xf32>
    %11 = vector.broadcast %10 : vector<1x128xf32> to vector<8x128xf32>
    %12 = arith.addf %9, %11 : vector<8x128xf32>
    %cst_11 = arith.constant 0.000000e+00 : f32
    %13 = vector.broadcast %cst_11 : f32 to vector<8x128xf32>
    %14 = arith.maximumf %12, %13 : vector<8x128xf32>
    %c0_12 = arith.constant 0 : index
    %c0_13 = arith.constant 0 : index
    %15 = vector.load %arg6[%c0_12, %c0_13] : memref<128x128xf32, #tpu.memory_space<vmem>>, vector<128x128xf32>
    %cst_14 = arith.constant dense<0.000000e+00> : vector<8x128xf32>
    %16 = tpu.matmul %14, %15, %cst_14 {dimension_numbers = #tpu.dot_dimension_numbers<[1], [0], [0], [1], [0, 0, 1, 1], [], []>} : vector<8x128xf32>, vector<128x128xf32>, vector<8x128xf32> -> vector<8x128xf32>
    %c0_15 = arith.constant 0 : index
    %c0_16 = arith.constant 0 : index
    %17 = vector.load %arg7[%c0_15, %c0_16] : memref<1x128xf32, #tpu.memory_space<vmem>>, vector<1x128xf32>
    %18 = vector.broadcast %17 : vector<1x128xf32> to vector<8x128xf32>
    %19 = arith.addf %16, %18 : vector<8x128xf32>
    %c0_17 = arith.constant 0 : index
    %c0_18 = arith.constant 0 : index
    %20 = vector.load %arg8[%c0_17, %c0_18] : memref<8x128xf32, #tpu.memory_space<vmem>>, vector<8x128xf32>
    tpu.vector_store %arg8[%c0_17, %c0_18], %19 {strides = array<i32>} : memref<8x128xf32, #tpu.memory_space<vmem>>, vector<8x128xf32>,
    return
  }
  func.func @transform_0(%arg0: i32) -> (i32, i32) {
    %c0_i32 = arith.constant 0 : i32
    %c0_i32_0 = arith.constant 0 : i32
    return %arg0, %c0_i32 : i32, i32
  }
  func.func @transform_1(%arg0: i32) -> (i32, i32) {
    %c0_i32 = arith.constant 0 : i32
    %c0_i32_0 = arith.constant 0 : i32
    %c0_i32_1 = arith.constant 0 : i32
    return %c0_i32, %c0_i32_0 : i32, i32
  }
  func.func @transform_2(%arg0: i32) -> (i32, i32) {
    %c0_i32 = arith.constant 0 : i32
    %c0_i32_0 = arith.constant 0 : i32
    %c0_i32_1 = arith.constant 0 : i32
    return %c0_i32, %c0_i32_0 : i32, i32
  }
  func.func @transform_3(%arg0: i32) -> (i32, i32) {
    %c0_i32 = arith.constant 0 : i32
    %c0_i32_0 = arith.constant 0 : i32
    %c0_i32_1 = arith.constant 0 : i32
    return %c0_i32, %c0_i32_0 : i32, i32
  }
  func.func @transform_4(%arg0: i32) -> (i32, i32) {
    %c0_i32 = arith.constant 0 : i32
    %c0_i32_0 = arith.constant 0 : i32
    %c0_i32_1 = arith.constant 0 : i32
    return %c0_i32, %c0_i32_0 : i32, i32
  }
  func.func @transform_5(%arg0: i32) -> (i32, i32) {
    %c0_i32 = arith.constant 0 : i32
    %c0_i32_0 = arith.constant 0 : i32
    %c0_i32_1 = arith.constant 0 : i32
    return %c0_i32, %c0_i32_0 : i32, i32
  }
  func.func @transform_6(%arg0: i32) -> (i32, i32) {
    %c0_i32 = arith.constant 0 : i32
    %c0_i32_0 = arith.constant 0 : i32
    %c0_i32_1 = arith.constant 0 : i32
    return %c0_i32, %c0_i32_0 : i32, i32
  }
  func.func @transform_7(%arg0: i32) -> (i32, i32) {
    %c0_i32 = arith.constant 0 : i32
    %c0_i32_0 = arith.constant 0 : i32
    return %arg0, %c0_i32 : i32, i32
  }
}

</mosaic_0001>

<llo_original>
// kernel: dqn_forward.1
$region0: #{dqn_forward.1}
  #allocation0 [shape = 'u32[]', space=smem, size = 0x4, offset = 0x4, fixed_abs, tag = 'smem constant byte address 0x4 - core index']
  #allocation1 [shape = 'u32[72,128]{1,0:T(1,128)}', space=vmem, size = 0x9000, scoped, tag = 'internal scratch']
  %s0 = inlined_call_operand.vmem [shape: f32[8,8], index: 0, kind: input, shape index: {}]
  %s1 = inlined_call_operand.vmem [shape: f32[8,128], index: 1, kind: input, shape index: {}]
  %s2 = inlined_call_operand.vmem [shape: f32[1,128], index: 2, kind: input, shape index: {}]
  %s3 = inlined_call_operand.hbm [shape: f32[128,128], index: 3, kind: input, shape index: {}]
  %s4 = inlined_call_operand.vmem [shape: f32[1,128], index: 4, kind: input, shape index: {}]
  %s5 = inlined_call_operand.hbm [shape: f32[128,128], index: 5, kind: input, shape index: {}]
  %s6 = inlined_call_operand.vmem [shape: f32[1,128], index: 6, kind: input, shape index: {}]
  %s7 = inlined_call_operand.vmem [shape: f32[8,128], index: 7, kind: output, shape index: {}]
  %s8 = sld [smem:[#allocation0]]
  $region46: #{dqn_forward.1} parent=0
    _
  %s10 = ssub.s32 1, %s8
  %s11 = scalar_select 0, %s10, %s8
  $region1: #{dqn_forward.1} parent=0
    #allocation2 [shape = 'u8[65536]{0}', space=vmem, size = 0x10000, scoped, tag = 'input window, operand 3, single buffered']
    #allocation3 [shape = 's32[1]{0}', space=sflag, size = 0x4, scoped, tag = 'scoped memory for dqn_forward.1']
    #allocation4 [shape = 'u8[65536]{0}', space=vmem, size = 0x10000, scoped, tag = 'input window, operand 5, single buffered']
    #allocation5 [shape = 's32[1]{0}', space=sflag, size = 0x4, scoped, tag = 'scoped memory for dqn_forward.1']
    %12 = vsyncpa [#allocation3], 0
    %13 = vsyncpa [#allocation5], 0
    // Predicated region
    $region2: #{dqn_forward.1} parent=1 // pred_check
      _
    $region3: #{dqn_forward.1} parent=1 // pred_check_branch
      %15 = sbr.rel (0) target = $region5
    $region4: #{dqn_forward.1} parent=1 // pred_region
      _
    $region5: #{dqn_forward.1} parent=1 // pred_fallthru
      _
    // Predicated region
    $region6: #{dqn_forward.1} parent=1 // pred_check
      _
    $region7: #{dqn_forward.1} parent=1 // pred_check_branch
      %17 = sbr.rel (0) target = $region9
    $region8: #{dqn_forward.1} parent=1 // pred_region
      _
    $region9: #{dqn_forward.1} parent=1 // pred_fallthru
      _
    // Predicated region
    $region10: #{dqn_forward.1} parent=1 // pred_check
      _
    $region11: #{dqn_forward.1} parent=1 // pred_check_branch
      %19 = sbr.rel (0) target = $region13
    $region12: #{dqn_forward.1} parent=1 // pred_region
      _
    $region13: #{dqn_forward.1} parent=1 // pred_fallthru
      _
    // Predicated region
    $region14: #{dqn_forward.1} parent=1 // pred_check
      _
    $region15: #{dqn_forward.1} parent=1 // pred_check_branch
      %21 = sbr.rel (0) target = $region17
    $region16: #{dqn_forward.1} parent=1 // pred_region
      %23 = vsyncadd [#allocation3], 0
      %s24 = sshll.u32 %s3, 4
      %s25 = int_to_ptr.hbm [resolvable:$true] %s24
      %s26 = sshll.u32 [#allocation2], 4
      %s27 = int_to_ptr.vmem [resolvable:$true] %s26
      %32 = dma.hbm_to_vmem [thread:$0]  %s25, 2048, %s27, [#allocation3], 128, 128, 8
    $region17: #{dqn_forward.1} parent=1 // pred_fallthru
      _
    // Predicated region
    $region18: #{dqn_forward.1} parent=1 // pred_check
      _
    $region19: #{dqn_forward.1} parent=1 // pred_check_branch
      %34 = sbr.rel (0) target = $region21
    $region20: #{dqn_forward.1} parent=1 // pred_region
      _
    $region21: #{dqn_forward.1} parent=1 // pred_fallthru
      _
    // Predicated region
    $region22: #{dqn_forward.1} parent=1 // pred_check
      _
    $region23: #{dqn_forward.1} parent=1 // pred_check_branch
      %36 = sbr.rel (0) target = $region25
    $region24: #{dqn_forward.1} parent=1 // pred_region
      %38 = vsyncadd [#allocation5], 0
      %s39 = sshll.u32 %s5, 4
      %s40 = int_to_ptr.hbm [resolvable:$true] %s39
      %s41 = sshll.u32 [#allocation4], 4
      %s42 = int_to_ptr.vmem [resolvable:$true] %s41
      %47 = dma.hbm_to_vmem [thread:$0]  %s40, 2048, %s42, [#allocation5], 128, 128, 8
    $region25: #{dqn_forward.1} parent=1 // pred_fallthru
      _
    // Predicated region
    $region26: #{dqn_forward.1} parent=1 // pred_check
      _
    $region27: #{dqn_forward.1} parent=1 // pred_check_branch
      %49 = sbr.rel (0) target = $region29
    $region28: #{dqn_forward.1} parent=1 // pred_region
      _
    $region29: #{dqn_forward.1} parent=1 // pred_fallthru
      _
    // Predicated region
    $region30: #{dqn_forward.1} parent=1 // pred_check
      _
    $region31: #{dqn_forward.1} parent=1 // pred_check_branch
      %51 = sbr.rel (0) target = $region33
    $region32: #{dqn_forward.1} parent=1 // pred_region
      %53 = dma.done [#allocation3], 2048
    $region33: #{dqn_forward.1} parent=1 // pred_fallthru
      _
    // Predicated region
    $region34: #{dqn_forward.1} parent=1 // pred_check
      _
    $region35: #{dqn_forward.1} parent=1 // pred_check_branch
      %55 = sbr.rel (0) target = $region37
    $region36: #{dqn_forward.1} parent=1 // pred_region
      %57 = dma.done [#allocation5], 2048
    $region37: #{dqn_forward.1} parent=1 // pred_fallthru
      _
    %v58 = vld [vmem:[%s0] sm:$0xff]
    %v59 = vld [vmem:[%s1] sm:$0xff]
    %v60 = vld [vmem:[%s2] sm:$0x1]
    %v62 = vperm.slane %v60, 0
    %vm64 = vcmask 64512
    %v66 = vsel %vm64, %v58, 0
    %68 = vmatpush.msra.mxu0 0.0
    %69 = vmatpush.msra.mxu0 0.0
    %70 = vmatpush.msra.mxu0 0.0
    %71 = vmatpush.msra.mxu0 0.0
    %72 = vmatpush.msra.mxu0 0.0
    %73 = vmatpush.msra.mxu0 0.0
    %74 = vmatpush.msra.mxu0 0.0
    %75 = vmatpush.msra.mxu0 0.0
    %76 = vmatpush.msra.mxu0 0.0
    %77 = vmatpush.msra.mxu0 0.0
    %78 = vmatpush.msra.mxu0 0.0
    %79 = vmatpush.msra.mxu0 0.0
    %80 = vmatpush.msra.mxu0 0.0
    %81 = vmatpush.msra.mxu0 0.0
    %82 = vmatpush.msra.mxu0 0.0
    %83 = vmatpush.msra.mxu0 %v59
    %84 = vmatmul.f32.gmra.mxu0 %v66
    %v85 = vpop.f32.mrf.mxu0
    %v86 = vadd.f32 %v62, %v85
    %87 = vdwg.mxu0
    %v88 = vmax.f32 %v86, 0.0
    %v89 = vld [vmem:[#allocation2] sm:$0xff]
    %v90 = vld [vmem:[#allocation2 + $0x8] sm:$0xff]
    %v91 = vld [vmem:[#allocation2 + $0x10] sm:$0xff]
    %v92 = vld [vmem:[#allocation2 + $0x18] sm:$0xff]
    %v93 = vld [vmem:[#allocation2 + $0x20] sm:$0xff]
    %v94 = vld [vmem:[#allocation2 + $0x28] sm:$0xff]
    %v95 = vld [vmem:[#allocation2 + $0x30] sm:$0xff]
    %v96 = vld [vmem:[#allocation2 + $0x38] sm:$0xff]
    %v97 = vld [vmem:[#allocation2 + $0x40] sm:$0xff]
    %v98 = vld [vmem:[#allocation2 + $0x48] sm:$0xff]
    %v99 = vld [vmem:[#allocation2 + $0x50] sm:$0xff]
    %v100 = vld [vmem:[#allocation2 + $0x58] sm:$0xff]
    %v101 = vld [vmem:[#allocation2 + $0x60] sm:$0xff]
    %v102 = vld [vmem:[#allocation2 + $0x68] sm:$0xff]
    %v103 = vld [vmem:[#allocation2 + $0x70] sm:$0xff]
    %v104 = vld [vmem:[#allocation2 + $0x78] sm:$0xff]
    %v105 = vld [vmem:[%s4] sm:$0x1]
    %v107 = vperm.slane %v105, 0
    %109 = vmatpush.msra.mxu0 %v104
    %110 = vmatpush.msra.mxu0 %v103
    %111 = vmatpush.msra.mxu0 %v102
    %112 = vmatpush.msra.mxu0 %v101
    %113 = vmatpush.msra.mxu0 %v100
    %114 = vmatpush.msra.mxu0 %v99
    %115 = vmatpush.msra.mxu0 %v98
    %116 = vmatpush.msra.mxu0 %v97
    %117 = vmatpush.msra.mxu0 %v96
    %118 = vmatpush.msra.mxu0 %v95
    %119 = vmatpush.msra.mxu0 %v94
    %120 = vmatpush.msra.mxu0 %v93
    %121 = vmatpush.msra.mxu0 %v92
    %122 = vmatpush.msra.mxu0 %v91
    %123 = vmatpush.msra.mxu0 %v90
    %124 = vmatpush.msra.mxu0 %v89
    %125 = vmatmul.f32.gmra.mxu0 %v88
    %v126 = vpop.f32.mrf.mxu0
    %v127 = vadd.f32 %v107, %v126
    %128 = vdwg.mxu0
    %v129 = vmax.f32 %v127, 0.0
    %v130 = vld [vmem:[#allocation4] sm:$0xff]
    %v131 = vld [vmem:[#allocation4 + $0x8] sm:$0xff]
    %v132 = vld [vmem:[#allocation4 + $0x10] sm:$0xff]
    %v133 = vld [vmem:[#allocation4 + $0x18] sm:$0xff]
    %v134 = vld [vmem:[#allocation4 + $0x20] sm:$0xff]
    %v135 = vld [vmem:[#allocation4 + $0x28] sm:$0xff]
    %v136 = vld [vmem:[#allocation4 + $0x30] sm:$0xff]
    %v137 = vld [vmem:[#allocation4 + $0x38] sm:$0xff]
    %v138 = vld [vmem:[#allocation4 + $0x40] sm:$0xff]
    %v139 = vld [vmem:[#allocation4 + $0x48] sm:$0xff]
    %v140 = vld [vmem:[#allocation4 + $0x50] sm:$0xff]
    %v141 = vld [vmem:[#allocation4 + $0x58] sm:$0xff]
    %v142 = vld [vmem:[#allocation4 + $0x60] sm:$0xff]
    %v143 = vld [vmem:[#allocation4 + $0x68] sm:$0xff]
    %v144 = vld [vmem:[#allocation4 + $0x70] sm:$0xff]
    %v145 = vld [vmem:[#allocation4 + $0x78] sm:$0xff]
    %v146 = vld [vmem:[%s6] sm:$0x1]
    %v148 = vperm.slane %v146, 0
    %150 = vmatpush.msra.mxu0 %v145
    %151 = vmatpush.msra.mxu0 %v144
    %152 = vmatpush.msra.mxu0 %v143
    %153 = vmatpush.msra.mxu0 %v142
    %154 = vmatpush.msra.mxu0 %v141
    %155 = vmatpush.msra.mxu0 %v140
    %156 = vmatpush.msra.mxu0 %v139
    %157 = vmatpush.msra.mxu0 %v138
    %158 = vmatpush.msra.mxu0 %v137
    %159 = vmatpush.msra.mxu0 %v136
    %160 = vmatpush.msra.mxu0 %v135
    %161 = vmatpush.msra.mxu0 %v134
    %162 = vmatpush.msra.mxu0 %v133
    %163 = vmatpush.msra.mxu0 %v132
    %164 = vmatpush.msra.mxu0 %v131
    %165 = vmatpush.msra.mxu0 %v130
    %166 = vmatmul.f32.gmra.mxu0 %v129
    %v167 = vpop.f32.mrf.mxu0
    %v168 = vadd.f32 %v148, %v167
    %169 = vdwg.mxu0
    %170 = vst [vmem:[%s7] sm:$0xff] %v168
    // Predicated region
    $region38: #{dqn_forward.1} parent=1 // pred_check
      _
    $region39: #{dqn_forward.1} parent=1 // pred_check_branch
      %172 = sbr.rel (0) target = $region41
    $region40: #{dqn_forward.1} parent=1 // pred_region
      _
    $region41: #{dqn_forward.1} parent=1 // pred_fallthru
      _
    // Predicated region
    $region42: #{dqn_forward.1} parent=1 // pred_check
      _
    $region43: #{dqn_forward.1} parent=1 // pred_check_branch
      %174 = sbr.rel (0) target = $region45
    $region44: #{dqn_forward.1} parent=1 // pred_region
      _
    $region45: #{dqn_forward.1} parent=1 // pred_fallthru
      _
    %175 = vsyncpa [#allocation3], 1
    %176 = vsyncpa [#allocation5], 1

</llo_original>
